<compile_context>
chip_gen: v7x
topology: tpu7x:2x2x1
jax: 0.10.0
libtpu: 0.0.40
codegen_flags: <defaults>
</compile_context>

<pallas_src>
import functools

import jax
import jax.numpy as jnp
from jax.experimental import pallas as pl
from jax.experimental.pallas import tpu as pltpu


def _lstm_recurrence_kernel(gx_ref, whh_ref, h_all_ref, h_scr, c_scr, *,
                            t_chunk, hidden_size):
    """One time-chunk of the LSTM recurrence (h/c carried in VMEM scratch).

    gx_ref    : (t_chunk, B, 4H) bf16  precomputed x_t @ W_ih^T + (b_ih + b_hh)
    whh_ref   : (H, 4H)          bf16  hidden->gates weight (transposed), resident
    h_all_ref : (t_chunk, B, H)  f32   hidden states for this chunk (output)
    h_scr/c_scr : (B, H)         f32   recurrent carry across grid steps
    """
    H = hidden_size
    B = gx_ref.shape[1]

    # Zero the recurrent carry on the first chunk only (accumulator-init pattern).
    @pl.when(pl.program_id(0) == 0)
    def _():
        h_scr[...] = jnp.zeros_like(h_scr)
        c_scr[...] = jnp.zeros_like(c_scr)

    whh = whh_ref[...]                                   # bf16, loaded once per chunk

    # Gate order is (i, f, g, o); only the g block (lanes [2H, 3H)) uses tanh.
    # Single-tanh trick: sigmoid(x) = 0.5*tanh(x/2) + 0.5, so one full-vreg EUP push
    # per step (plus tanh(c)) instead of two; the scale/blend run on the VPU.
    # Mask and scale are built once, hoisted out of the time loop.
    lane = jax.lax.broadcasted_iota(jnp.int32, (B, 4 * H), 1)
    is_g_lane = (lane >= 2 * H) & (lane < 3 * H)
    gate_scale = jnp.where(is_g_lane, 1.0, 0.5).astype(jnp.float32)

    def step(t, carry):
        h_prev, c_prev = carry
        # bf16 operands on the MXU (full rate on v5e/v6e/v7x), f32 accumulation.
        # Elementwise gate math stays f32 (v5e VPU/EUP have no bf16 path).
        rec = jnp.dot(h_prev.astype(whh.dtype), whh,
                      preferred_element_type=jnp.float32)
        gates = gx_ref[t].astype(jnp.float32) + rec
        tnh = jnp.tanh(gates * gate_scale)
        act = jnp.where(is_g_lane, tnh, 0.5 * tnh + 0.5)           # (B, 4H)
        i_g = act[:, 0 * H:1 * H]
        f_g = act[:, 1 * H:2 * H]
        g_g = act[:, 2 * H:3 * H]
        o_g = act[:, 3 * H:4 * H]
        c_new = f_g * c_prev + i_g * g_g
        h_new = o_g * jnp.tanh(c_new)
        h_all_ref[t] = h_new.astype(h_all_ref.dtype)
        return (h_new, c_new)

    # Full unroll for short chunks; partial (8x) unroll otherwise so the LLO scheduler
    # can overlap the gx load / h store / next MXU push with the current EUP/VPU tail.
    unroll = True if t_chunk <= 32 else 8
    h, c = jax.lax.fori_loop(0, t_chunk, step, (h_scr[...], c_scr[...]),
                             unroll=unroll)
    h_scr[...] = h
    c_scr[...] = c


def lstm_timeseries_forward(x, params):
    """x: (B, T, Din) batch_first float32 -> (B, T, O), matching the PyTorch module."""
    B, T, Din = x.shape
    w_ih, w_hh = params["w_ih"], params["w_hh"]
    b_ih, b_hh = params["b_ih"], params["b_hh"]
    w_fc, b_fc = params["w_fc"], params["b_fc"]
    H = w_hh.shape[1]

    # Pad batch to a sublane multiple (8) so per-step (B, 4H) vregs are denser.
    B_pad = ((B + 7) // 8) * 8
    x_f = x.astype(jnp.float32)
    if B_pad != B:
        x_f = jnp.pad(x_f, ((0, B_pad - B), (0, 0), (0, 0)))
    x_tm = jnp.transpose(x_f, (1, 0, 2))                          # (T, B_pad, Din)

    wih_t = jnp.transpose(w_ih).astype(jnp.float32)               # (Din, 4H)
    whh_bf = jnp.transpose(w_hh).astype(jnp.bfloat16)             # (H, 4H) bf16 MXU operand
    wfc_t = jnp.transpose(w_fc).astype(jnp.float32)               # (H, O)
    b_gates = (b_ih + b_hh).astype(jnp.float32)                   # (4H,)

    # Hoisted input projection + folded LSTM bias: one MXU-friendly matmul over all
    # timesteps; stored bf16 (largest array crossing the pallas_call boundary).
    gates_x = (jnp.einsum("tbd,dg->tbg", x_tm, wih_t,
                          preferred_element_type=jnp.float32)
               + b_gates).astype(jnp.bfloat16)                    # (T, B_pad, 4H) bf16

    # --- Time-chunk sizing: double-buffered chunk streams must fit a VMEM budget that
    # is safe on every generation (v7x physical VMEM is 64 MiB, half of v5e/v6e). ---
    gate_bytes = 2                                                # bf16 gates_x
    h_bytes = 4                                                   # f32 h_all
    per_step_bytes = B_pad * (4 * H * gate_bytes + H * h_bytes)
    stream_budget = 16 * 1024 * 1024                              # double-buffered streams
    t_chunk = int(max(1, min(T, stream_budget // (2 * per_step_bytes))))
    n_chunks = pl.cdiv(T, t_chunk)
    T_pad = n_chunks * t_chunk
    if T_pad != T:
        gates_x = jnp.pad(gates_x, ((0, T_pad - T), (0, 0), (0, 0)))

    # Explicit scoped-VMEM limit sized to the resident bytes (with headroom); the
    # defaults (16 MiB v5e / 32 MiB v6e, v7x) are far below physical.
    vmem_bytes = (2 * t_chunk * per_step_bytes                    # pipelined chunk buffers
                  + 2 * H * 4 * H * 2                             # W_hh bf16 (buffered)
                  + 2 * B_pad * H * 4                             # h/c carries
                  + (4 << 20))                                    # headroom
    vmem_bytes = int(min(max(vmem_bytes, 32 * 1024 * 1024), 48 * 1024 * 1024))

    kernel = functools.partial(_lstm_recurrence_kernel, t_chunk=t_chunk, hidden_size=H)
    h_all = pl.pallas_call(
        kernel,
        out_shape=jax.ShapeDtypeStruct((T_pad, B_pad, H), jnp.float32),
        grid_spec=pltpu.PrefetchScalarGridSpec(
            num_scalar_prefetch=0,
            grid=(n_chunks,),
            in_specs=[
                pl.BlockSpec((t_chunk, B_pad, 4 * H), lambda t: (t, 0, 0)),  # gates_x chunk
                pl.BlockSpec((H, 4 * H), lambda t: (0, 0)),                  # W_hh^T resident
            ],
            out_specs=pl.BlockSpec((t_chunk, B_pad, H), lambda t: (t, 0, 0)),
            scratch_shapes=[
                pltpu.VMEM((B_pad, H), jnp.float32),   # h carry
                pltpu.VMEM((B_pad, H), jnp.float32),   # c carry
            ],
        ),
        compiler_params=pltpu.CompilerParams(
            dimension_semantics=("arbitrary",),        # time axis carries h/c state
            vmem_limit_bytes=vmem_bytes,
        ),
    )(gates_x, whh_bf)

    # Hoisted FC head + bias: one (T*B, H) @ (H, O) matmul instead of T lane-sparse
    # masked stores inside the kernel.
    out_tm = jnp.einsum("tbh,ho->tbo", h_all[:T], wfc_t,
                        preferred_element_type=jnp.float32) + b_fc.astype(jnp.float32)
    return jnp.transpose(out_tm, (1, 0, 2))[:B]                   # (B, T, O)


def _reference_forward(x, params):
    """Pure-JAX f32 reference (PyTorch LSTM gate order i, f, g, o) for validation."""
    w_ih, w_hh = params["w_ih"], params["w_hh"]
    b = params["b_ih"] + params["b_hh"]
    w_fc, b_fc = params["w_fc"], params["b_fc"]
    H = w_hh.shape[1]
    B = x.shape[0]

    def step(carry, x_t):
        h, c = carry
        gates = x_t @ w_ih.T + h @ w_hh.T + b
        i = jax.nn.sigmoid(gates[:, 0 * H:1 * H])
        f = jax.nn.sigmoid(gates[:, 1 * H:2 * H])
        g = jnp.tanh(gates[:, 2 * H:3 * H])
        o = jax.nn.sigmoid(gates[:, 3 * H:4 * H])
        c = f * c + i * g
        h = o * jnp.tanh(c)
        return (h, c), h

    h0 = jnp.zeros((B, H), jnp.float32)
    c0 = jnp.zeros((B, H), jnp.float32)
    _, hs = jax.lax.scan(step, (h0, c0), jnp.transpose(x, (1, 0, 2)))  # (T, B, H)
    out = hs @ w_fc.T + b_fc
    return jnp.transpose(out, (1, 0, 2))


if __name__ == "__main__":
    # Small shapes consistent with the module: batch=2, seq=8, input=16, hidden=32, output=4.
    B, T, Din, H, O = 2, 8, 16, 32, 4

    key = jax.random.PRNGKey(0)
    ks = jax.random.split(key, 7)
    scale = 1.0 / jnp.sqrt(jnp.float32(H))   # PyTorch-style uniform(-1/sqrt(H), 1/sqrt(H))
    params = {
        "w_ih": jax.random.uniform(ks[0], (4 * H, Din), jnp.float32, -scale, scale),
        "w_hh": jax.random.uniform(ks[1], (4 * H, H), jnp.float32, -scale, scale),
        "b_ih": jax.random.uniform(ks[2], (4 * H,), jnp.float32, -scale, scale),
        "b_hh": jax.random.uniform(ks[3], (4 * H,), jnp.float32, -scale, scale),
        "w_fc": jax.random.uniform(ks[4], (O, H), jnp.float32, -scale, scale),
        "b_fc": jax.random.uniform(ks[5], (O,), jnp.float32, -scale, scale),
    }
    x = jax.random.normal(ks[6], (B, T, Din), jnp.float32)

    forward = jax.jit(lstm_timeseries_forward)
    out = jax.block_until_ready(forward(x, params))

    ref = jax.block_until_ready(_reference_forward(x, params))
    assert out.shape == (B, T, O), out.shape
    # Looser tolerance: bf16 gates_x storage + bf16 MXU operands (f32 accumulate).
    assert jnp.allclose(out, ref, atol=2e-2, rtol=2e-2), float(jnp.max(jnp.abs(out - ref)))

    print("KERNEL_OK")
</pallas_src>

<mosaic_0001>
module attributes {stable_mosaic.version = 11 : i64} {
  func.func @_lstm_recurrence_kernel(%arg0: i32, %arg1: memref<8x8x128xbf16, #tpu.memory_space<vmem>>, %arg2: memref<32x128xbf16, #tpu.memory_space<vmem>>, %arg3: memref<8x8x32xf32, #tpu.memory_space<vmem>>, %arg4: memref<8x32xf32, #tpu.memory_space<vmem>>, %arg5: memref<8x32xf32, #tpu.memory_space<vmem>>) attributes {dimension_semantics = [#tpu.dimension_semantics<arbitrary>], iteration_bounds = array<i64: 1>, scalar_prefetch = 0 : i64, scratch_operands = 2 : i64, tpu.core_type = #tpu.core_type<tc>, window_params = [{transform_indices = @transform_0, window_bounds = array<i64: 8, 8, 128>}, {pipeline_mode = #tpu.pipeline_mode<synchronous>, transform_indices = @transform_1, window_bounds = array<i64: 32, 128>}, {transform_indices = @transform_2, window_bounds = array<i64: 8, 8, 32>}]} {
    %c0_i32 = arith.constant 0 : i32
    %0 = arith.cmpi eq, %arg0, %c0_i32 : i32
    %1 = arith.extui %0 : i1 to i32
    %c0_i32_0 = arith.constant 0 : i32
    %2 = arith.cmpi ne, %1, %c0_i32_0 : i32
    scf.if %2 {
      %cst_68 = arith.constant 0.000000e+00 : f32
      %233 = vector.broadcast %cst_68 : f32 to vector<8x32xf32>
      %c0_69 = arith.constant 0 : index
      %c0_70 = arith.constant 0 : index
      %234 = vector.load %arg4[%c0_69, %c0_70] : memref<8x32xf32, #tpu.memory_space<vmem>>, vector<8x32xf32>
      tpu.vector_store %arg4[%c0_69, %c0_70], %233 {strides = array<i32>} : memref<8x32xf32, #tpu.memory_space<vmem>>, vector<8x32xf32>,
      %cst_71 = arith.constant 0.000000e+00 : f32
      %235 = vector.broadcast %cst_71 : f32 to vector<8x32xf32>
      %c0_72 = arith.constant 0 : index
      %c0_73 = arith.constant 0 : index
      %236 = vector.load %arg5[%c0_72, %c0_73] : memref<8x32xf32, #tpu.memory_space<vmem>>, vector<8x32xf32>
      tpu.vector_store %arg5[%c0_72, %c0_73], %235 {strides = array<i32>} : memref<8x32xf32, #tpu.memory_space<vmem>>, vector<8x32xf32>,
    } else {
    }
    %c0 = arith.constant 0 : index
    %c0_1 = arith.constant 0 : index
    %3 = vector.load %arg2[%c0, %c0_1] : memref<32x128xbf16, #tpu.memory_space<vmem>>, vector<32x128xbf16>
    %4 = tpu.iota {dimensions = array<i32: 1>} : vector<8x128xi32>
    %c64_i32 = arith.constant 64 : i32
    %5 = vector.broadcast %c64_i32 : i32 to vector<8x128xi32>
    %6 = arith.cmpi sge, %4, %5 : vector<8x128xi32>
    %c96_i32 = arith.constant 96 : i32
    %7 = vector.broadcast %c96_i32 : i32 to vector<8x128xi32>
    %8 = arith.cmpi slt, %4, %7 : vector<8x128xi32>
    %9 = arith.andi %6, %8 : vector<8x128xi1>
    %cst = arith.constant 1.000000e+00 : f32
    %cst_2 = arith.constant 5.000000e-01 : f32
    %10 = vector.broadcast %cst : f32 to vector<8x128xf32>
    %11 = vector.broadcast %cst_2 : f32 to vector<8x128xf32>
    %12 = arith.select %9, %10, %11 : vector<8x128xi1>, vector<8x128xf32>
    %c0_3 = arith.constant 0 : index
    %c0_4 = arith.constant 0 : index
    %13 = vector.load %arg4[%c0_3, %c0_4] : memref<8x32xf32, #tpu.memory_space<vmem>>, vector<8x32xf32>
    %c0_5 = arith.constant 0 : index
    %c0_6 = arith.constant 0 : index
    %14 = vector.load %arg5[%c0_5, %c0_6] : memref<8x32xf32, #tpu.memory_space<vmem>>, vector<8x32xf32>
    %c0_i32_7 = arith.constant 0 : i32
    %15 = arith.truncf %13 : vector<8x32xf32> to vector<8x32xbf16>
    %cst_8 = arith.constant dense<0.000000e+00> : vector<8x128xf32>
    %16 = tpu.matmul %15, %3, %cst_8 {dimension_numbers = #tpu.dot_dimension_numbers<[1], [0], [0], [1], [0, 0, 1, 1], [], []>} : vector<8x32xbf16>, vector<32x128xbf16>, vector<8x128xf32> -> vector<8x128xf32>
    %17 = arith.index_cast %c0_i32_7 : i32 to index
    %c0_9 = arith.constant 0 : index
    %c0_10 = arith.constant 0 : index
    %18 = vector.load %arg1[%17, %c0_9, %c0_10] : memref<8x8x128xbf16, #tpu.memory_space<vmem>>, vector<1x8x128xbf16>
    %19 = vector.shape_cast %18 : vector<1x8x128xbf16> to vector<8x128xbf16>
    %20 = arith.extf %19 : vector<8x128xbf16> to vector<8x128xf32>
    %21 = arith.addf %20, %16 : vector<8x128xf32>
    %22 = arith.mulf %21, %12 : vector<8x128xf32>
    %23 = math.tanh %22 : vector<8x128xf32>
    %cst_11 = arith.constant 5.000000e-01 : f32
    %24 = vector.broadcast %cst_11 : f32 to vector<8x128xf32>
    %25 = arith.mulf %24, %23 : vector<8x128xf32>
    %cst_12 = arith.constant 5.000000e-01 : f32
    %26 = vector.broadcast %cst_12 : f32 to vector<8x128xf32>
    %27 = arith.addf %25, %26 : vector<8x128xf32>
    %28 = arith.select %9, %23, %27 : vector<8x128xi1>, vector<8x128xf32>
    %29 = vector.extract_strided_slice %28 {offsets = [0, 0], sizes = [8, 32], strides = [1, 1]} : vector<8x128xf32> to vector<8x32xf32>
    %30 = vector.extract_strided_slice %28 {offsets = [0, 32], sizes = [8, 32], strides = [1, 1]} : vector<8x128xf32> to vector<8x32xf32>
    %31 = vector.extract_strided_slice %28 {offsets = [0, 64], sizes = [8, 32], strides = [1, 1]} : vector<8x128xf32> to vector<8x32xf32>
    %32 = vector.extract_strided_slice %28 {offsets = [0, 96], sizes = [8, 32], strides = [1, 1]} : vector<8x128xf32> to vector<8x32xf32>
    %33 = arith.mulf %30, %14 : vector<8x32xf32>
    %34 = arith.mulf %29, %31 : vector<8x32xf32>
    %35 = arith.addf %33, %34 : vector<8x32xf32>
    %36 = math.tanh %35 : vector<8x32xf32>
    %37 = arith.mulf %32, %36 : vector<8x32xf32>
    %38 = arith.index_cast %c0_i32_7 : i32 to index
    %c0_13 = arith.constant 0 : index
    %c0_14 = arith.constant 0 : index
    %39 = vector.load %arg3[%38, %c0_13, %c0_14] : memref<8x8x32xf32, #tpu.memory_space<vmem>>, vector<1x8x32xf32>
    %40 = vector.shape_cast %39 : vector<1x8x32xf32> to vector<8x32xf32>
    %41 = vector.shape_cast %37 : vector<8x32xf32> to vector<1x8x32xf32>
    tpu.vector_store %arg3[%38, %c0_13, %c0_14], %41 {strides = array<i32>} : memref<8x8x32xf32, #tpu.memory_space<vmem>>, vector<1x8x32xf32>,
    %c1_i32 = arith.constant 1 : i32
    %42 = arith.truncf %37 : vector<8x32xf32> to vector<8x32xbf16>
    %cst_15 = arith.constant dense<0.000000e+00> : vector<8x128xf32>
    %43 = tpu.matmul %42, %3, %cst_15 {dimension_numbers = #tpu.dot_dimension_numbers<[1], [0], [0], [1], [0, 0, 1, 1], [], []>} : vector<8x32xbf16>, vector<32x128xbf16>, vector<8x128xf32> -> vector<8x128xf32>
    %44 = arith.index_cast %c1_i32 : i32 to index
    %c0_16 = arith.constant 0 : index
    %c0_17 = arith.constant 0 : index
    %45 = vector.load %arg1[%44, %c0_16, %c0_17] : memref<8x8x128xbf16, #tpu.memory_space<vmem>>, vector<1x8x128xbf16>
    %46 = vector.shape_cast %45 : vector<1x8x128xbf16> to vector<8x128xbf16>
    %47 = arith.extf %46 : vector<8x128xbf16> to vector<8x128xf32>
    %48 = arith.addf %47, %43 : vector<8x128xf32>
    %49 = arith.mulf %48, %12 : vector<8x128xf32>
    %50 = math.tanh %49 : vector<8x128xf32>
    %cst_18 = arith.constant 5.000000e-01 : f32
    %51 = vector.broadcast %cst_18 : f32 to vector<8x128xf32>
    %52 = arith.mulf %51, %50 : vector<8x128xf32>
    %cst_19 = arith.constant 5.000000e-01 : f32
    %53 = vector.broadcast %cst_19 : f32 to vector<8x128xf32>
    %54 = arith.addf %52, %53 : vector<8x128xf32>
    %55 = arith.select %9, %50, %54 : vector<8x128xi1>, vector<8x128xf32>
    %56 = vector.extract_strided_slice %55 {offsets = [0, 0], sizes = [8, 32], strides = [1, 1]} : vector<8x128xf32> to vector<8x32xf32>
    %57 = vector.extract_strided_slice %55 {offsets = [0, 32], sizes = [8, 32], strides = [1, 1]} : vector<8x128xf32> to vector<8x32xf32>
    %58 = vector.extract_strided_slice %55 {offsets = [0, 64], sizes = [8, 32], strides = [1, 1]} : vector<8x128xf32> to vector<8x32xf32>
    %59 = vector.extract_strided_slice %55 {offsets = [0, 96], sizes = [8, 32], strides = [1, 1]} : vector<8x128xf32> to vector<8x32xf32>
    %60 = arith.mulf %57, %35 : vector<8x32xf32>
    %61 = arith.mulf %56, %58 : vector<8x32xf32>
    %62 = arith.addf %60, %61 : vector<8x32xf32>
    %63 = math.tanh %62 : vector<8x32xf32>
    %64 = arith.mulf %59, %63 : vector<8x32xf32>
    %65 = arith.index_cast %c1_i32 : i32 to index
    %c0_20 = arith.constant 0 : index
    %c0_21 = arith.constant 0 : index
    %66 = vector.load %arg3[%65, %c0_20, %c0_21] : memref<8x8x32xf32, #tpu.memory_space<vmem>>, vector<1x8x32xf32>
    %67 = vector.shape_cast %66 : vector<1x8x32xf32> to vector<8x32xf32>
    %68 = vector.shape_cast %64 : vector<8x32xf32> to vector<1x8x32xf32>
    tpu.vector_store %arg3[%65, %c0_20, %c0_21], %68 {strides = array<i32>} : memref<8x8x32xf32, #tpu.memory_space<vmem>>, vector<1x8x32xf32>,
    %c2_i32 = arith.constant 2 : i32
    %69 = arith.truncf %64 : vector<8x32xf32> to vector<8x32xbf16>
    %cst_22 = arith.constant dense<0.000000e+00> : vector<8x128xf32>
    %70 = tpu.matmul %69, %3, %cst_22 {dimension_numbers = #tpu.dot_dimension_numbers<[1], [0], [0], [1], [0, 0, 1, 1], [], []>} : vector<8x32xbf16>, vector<32x128xbf16>, vector<8x128xf32> -> vector<8x128xf32>
    %71 = arith.index_cast %c2_i32 : i32 to index
    %c0_23 = arith.constant 0 : index
    %c0_24 = arith.constant 0 : index
    %72 = vector.load %arg1[%71, %c0_23, %c0_24] : memref<8x8x128xbf16, #tpu.memory_space<vmem>>, vector<1x8x128xbf16>
    %73 = vector.shape_cast %72 : vector<1x8x128xbf16> to vector<8x128xbf16>
    %74 = arith.extf %73 : vector<8x128xbf16> to vector<8x128xf32>
    %75 = arith.addf %74, %70 : vector<8x128xf32>
    %76 = arith.mulf %75, %12 : vector<8x128xf32>
    %77 = math.tanh %76 : vector<8x128xf32>
    %cst_25 = arith.constant 5.000000e-01 : f32
    %78 = vector.broadcast %cst_25 : f32 to vector<8x128xf32>
    %79 = arith.mulf %78, %77 : vector<8x128xf32>
    %cst_26 = arith.constant 5.000000e-01 : f32
    %80 = vector.broadcast %cst_26 : f32 to vector<8x128xf32>
    %81 = arith.addf %79, %80 : vector<8x128xf32>
    %82 = arith.select %9, %77, %81 : vector<8x128xi1>, vector<8x128xf32>
    %83 = vector.extract_strided_slice %82 {offsets = [0, 0], sizes = [8, 32], strides = [1, 1]} : vector<8x128xf32> to vector<8x32xf32>
    %84 = vector.extract_strided_slice %82 {offsets = [0, 32], sizes = [8, 32], strides = [1, 1]} : vector<8x128xf32> to vector<8x32xf32>
    %85 = vector.extract_strided_slice %82 {offsets = [0, 64], sizes = [8, 32], strides = [1, 1]} : vector<8x128xf32> to vector<8x32xf32>
    %86 = vector.extract_strided_slice %82 {offsets = [0, 96], sizes = [8, 32], strides = [1, 1]} : vector<8x128xf32> to vector<8x32xf32>
    %87 = arith.mulf %84, %62 : vector<8x32xf32>
    %88 = arith.mulf %83, %85 : vector<8x32xf32>
    %89 = arith.addf %87, %88 : vector<8x32xf32>
    %90 = math.tanh %89 : vector<8x32xf32>
    %91 = arith.mulf %86, %90 : vector<8x32xf32>
    %92 = arith.index_cast %c2_i32 : i32 to index
    %c0_27 = arith.constant 0 : index
    %c0_28 = arith.constant 0 : index
    %93 = vector.load %arg3[%92, %c0_27, %c0_28] : memref<8x8x32xf32, #tpu.memory_space<vmem>>, vector<1x8x32xf32>
    %94 = vector.shape_cast %93 : vector<1x8x32xf32> to vector<8x32xf32>
    %95 = vector.shape_cast %91 : vector<8x32xf32> to vector<1x8x32xf32>
    tpu.vector_store %arg3[%92, %c0_27, %c0_28], %95 {strides = array<i32>} : memref<8x8x32xf32, #tpu.memory_space<vmem>>, vector<1x8x32xf32>,
    %c3_i32 = arith.constant 3 : i32
    %96 = arith.truncf %91 : vector<8x32xf32> to vector<8x32xbf16>
    %cst_29 = arith.constant dense<0.000000e+00> : vector<8x128xf32>
    %97 = tpu.matmul %96, %3, %cst_29 {dimension_numbers = #tpu.dot_dimension_numbers<[1], [0], [0], [1], [0, 0, 1, 1], [], []>} : vector<8x32xbf16>, vector<32x128xbf16>, vector<8x128xf32> -> vector<8x128xf32>
    %98 = arith.index_cast %c3_i32 : i32 to index
    %c0_30 = arith.constant 0 : index
    %c0_31 = arith.constant 0 : index
    %99 = vector.load %arg1[%98, %c0_30, %c0_31] : memref<8x8x128xbf16, #tpu.memory_space<vmem>>, vector<1x8x128xbf16>
    %100 = vector.shape_cast %99 : vector<1x8x128xbf16> to vector<8x128xbf16>
    %101 = arith.extf %100 : vector<8x128xbf16> to vector<8x128xf32>
    %102 = arith.addf %101, %97 : vector<8x128xf32>
    %103 = arith.mulf %102, %12 : vector<8x128xf32>
    %104 = math.tanh %103 : vector<8x128xf32>
    %cst_32 = arith.constant 5.000000e-01 : f32
    %105 = vector.broadcast %cst_32 : f32 to vector<8x128xf32>
    %106 = arith.mulf %105, %104 : vector<8x128xf32>
    %cst_33 = arith.constant 5.000000e-01 : f32
    %107 = vector.broadcast %cst_33 : f32 to vector<8x128xf32>
    %108 = arith.addf %106, %107 : vector<8x128xf32>
    %109 = arith.select %9, %104, %108 : vector<8x128xi1>, vector<8x128xf32>
    %110 = vector.extract_strided_slice %109 {offsets = [0, 0], sizes = [8, 32], strides = [1, 1]} : vector<8x128xf32> to vector<8x32xf32>
    %111 = vector.extract_strided_slice %109 {offsets = [0, 32], sizes = [8, 32], strides = [1, 1]} : vector<8x128xf32> to vector<8x32xf32>
    %112 = vector.extract_strided_slice %109 {offsets = [0, 64], sizes = [8, 32], strides = [1, 1]} : vector<8x128xf32> to vector<8x32xf32>
    %113 = vector.extract_strided_slice %109 {offsets = [0, 96], sizes = [8, 32], strides = [1, 1]} : vector<8x128xf32> to vector<8x32xf32>
    %114 = arith.mulf %111, %89 : vector<8x32xf32>
    %115 = arith.mulf %110, %112 : vector<8x32xf32>
    %116 = arith.addf %114, %115 : vector<8x32xf32>
    %117 = math.tanh %116 : vector<8x32xf32>
    %118 = arith.mulf %113, %117 : vector<8x32xf32>
    %119 = arith.index_cast %c3_i32 : i32 to index
    %c0_34 = arith.constant 0 : index
    %c0_35 = arith.constant 0 : index
    %120 = vector.load %arg3[%119, %c0_34, %c0_35] : memref<8x8x32xf32, #tpu.memory_space<vmem>>, vector<1x8x32xf32>
    %121 = vector.shape_cast %120 : vector<1x8x32xf32> to vector<8x32xf32>
    %122 = vector.shape_cast %118 : vector<8x32xf32> to vector<1x8x32xf32>
    tpu.vector_store %arg3[%119, %c0_34, %c0_35], %122 {strides = array<i32>} : memref<8x8x32xf32, #tpu.memory_space<vmem>>, vector<1x8x32xf32>,
    %c4_i32 = arith.constant 4 : i32
    %123 = arith.truncf %118 : vector<8x32xf32> to vector<8x32xbf16>
    %cst_36 = arith.constant dense<0.000000e+00> : vector<8x128xf32>
    %124 = tpu.matmul %123, %3, %cst_36 {dimension_numbers = #tpu.dot_dimension_numbers<[1], [0], [0], [1], [0, 0, 1, 1], [], []>} : vector<8x32xbf16>, vector<32x128xbf16>, vector<8x128xf32> -> vector<8x128xf32>
    %125 = arith.index_cast %c4_i32 : i32 to index
    %c0_37 = arith.constant 0 : index
    %c0_38 = arith.constant 0 : index
    %126 = vector.load %arg1[%125, %c0_37, %c0_38] : memref<8x8x128xbf16, #tpu.memory_space<vmem>>, vector<1x8x128xbf16>
    %127 = vector.shape_cast %126 : vector<1x8x128xbf16> to vector<8x128xbf16>
    %128 = arith.extf %127 : vector<8x128xbf16> to vector<8x128xf32>
    %129 = arith.addf %128, %124 : vector<8x128xf32>
    %130 = arith.mulf %129, %12 : vector<8x128xf32>
    %131 = math.tanh %130 : vector<8x128xf32>
    %cst_39 = arith.constant 5.000000e-01 : f32
    %132 = vector.broadcast %cst_39 : f32 to vector<8x128xf32>
    %133 = arith.mulf %132, %131 : vector<8x128xf32>
    %cst_40 = arith.constant 5.000000e-01 : f32
    %134 = vector.broadcast %cst_40 : f32 to vector<8x128xf32>
    %135 = arith.addf %133, %134 : vector<8x128xf32>
    %136 = arith.select %9, %131, %135 : vector<8x128xi1>, vector<8x128xf32>
    %137 = vector.extract_strided_slice %136 {offsets = [0, 0], sizes = [8, 32], strides = [1, 1]} : vector<8x128xf32> to vector<8x32xf32>
    %138 = vector.extract_strided_slice %136 {offsets = [0, 32], sizes = [8, 32], strides = [1, 1]} : vector<8x128xf32> to vector<8x32xf32>
    %139 = vector.extract_strided_slice %136 {offsets = [0, 64], sizes = [8, 32], strides = [1, 1]} : vector<8x128xf32> to vector<8x32xf32>
    %140 = vector.extract_strided_slice %136 {offsets = [0, 96], sizes = [8, 32], strides = [1, 1]} : vector<8x128xf32> to vector<8x32xf32>
    %141 = arith.mulf %138, %116 : vector<8x32xf32>
    %142 = arith.mulf %137, %139 : vector<8x32xf32>
    %143 = arith.addf %141, %142 : vector<8x32xf32>
    %144 = math.tanh %143 : vector<8x32xf32>
    %145 = arith.mulf %140, %144 : vector<8x32xf32>
    %146 = arith.index_cast %c4_i32 : i32 to index
    %c0_41 = arith.constant 0 : index
    %c0_42 = arith.constant 0 : index
    %147 = vector.load %arg3[%146, %c0_41, %c0_42] : memref<8x8x32xf32, #tpu.memory_space<vmem>>, vector<1x8x32xf32>
    %148 = vector.shape_cast %147 : vector<1x8x32xf32> to vector<8x32xf32>
    %149 = vector.shape_cast %145 : vector<8x32xf32> to vector<1x8x32xf32>
    tpu.vector_store %arg3[%146, %c0_41, %c0_42], %149 {strides = array<i32>} : memref<8x8x32xf32, #tpu.memory_space<vmem>>, vector<1x8x32xf32>,
    %c5_i32 = arith.constant 5 : i32
    %150 = arith.truncf %145 : vector<8x32xf32> to vector<8x32xbf16>
    %cst_43 = arith.constant dense<0.000000e+00> : vector<8x128xf32>
    %151 = tpu.matmul %150, %3, %cst_43 {dimension_numbers = #tpu.dot_dimension_numbers<[1], [0], [0], [1], [0, 0, 1, 1], [], []>} : vector<8x32xbf16>, vector<32x128xbf16>, vector<8x128xf32> -> vector<8x128xf32>
    %152 = arith.index_cast %c5_i32 : i32 to index
    %c0_44 = arith.constant 0 : index
    %c0_45 = arith.constant 0 : index
    %153 = vector.load %arg1[%152, %c0_44, %c0_45] : memref<8x8x128xbf16, #tpu.memory_space<vmem>>, vector<1x8x128xbf16>
    %154 = vector.shape_cast %153 : vector<1x8x128xbf16> to vector<8x128xbf16>
    %155 = arith.extf %154 : vector<8x128xbf16> to vector<8x128xf32>
    %156 = arith.addf %155, %151 : vector<8x128xf32>
    %157 = arith.mulf %156, %12 : vector<8x128xf32>
    %158 = math.tanh %157 : vector<8x128xf32>
    %cst_46 = arith.constant 5.000000e-01 : f32
    %159 = vector.broadcast %cst_46 : f32 to vector<8x128xf32>
    %160 = arith.mulf %159, %158 : vector<8x128xf32>
    %cst_47 = arith.constant 5.000000e-01 : f32
    %161 = vector.broadcast %cst_47 : f32 to vector<8x128xf32>
    %162 = arith.addf %160, %161 : vector<8x128xf32>
    %163 = arith.select %9, %158, %162 : vector<8x128xi1>, vector<8x128xf32>
    %164 = vector.extract_strided_slice %163 {offsets = [0, 0], sizes = [8, 32], strides = [1, 1]} : vector<8x128xf32> to vector<8x32xf32>
    %165 = vector.extract_strided_slice %163 {offsets = [0, 32], sizes = [8, 32], strides = [1, 1]} : vector<8x128xf32> to vector<8x32xf32>
    %166 = vector.extract_strided_slice %163 {offsets = [0, 64], sizes = [8, 32], strides = [1, 1]} : vector<8x128xf32> to vector<8x32xf32>
    %167 = vector.extract_strided_slice %163 {offsets = [0, 96], sizes = [8, 32], strides = [1, 1]} : vector<8x128xf32> to vector<8x32xf32>
    %168 = arith.mulf %165, %143 : vector<8x32xf32>
    %169 = arith.mulf %164, %166 : vector<8x32xf32>
    %170 = arith.addf %168, %169 : vector<8x32xf32>
    %171 = math.tanh %170 : vector<8x32xf32>
    %172 = arith.mulf %167, %171 : vector<8x32xf32>
    %173 = arith.index_cast %c5_i32 : i32 to index
    %c0_48 = arith.constant 0 : index
    %c0_49 = arith.constant 0 : index
    %174 = vector.load %arg3[%173, %c0_48, %c0_49] : memref<8x8x32xf32, #tpu.memory_space<vmem>>, vector<1x8x32xf32>
    %175 = vector.shape_cast %174 : vector<1x8x32xf32> to vector<8x32xf32>
    %176 = vector.shape_cast %172 : vector<8x32xf32> to vector<1x8x32xf32>
    tpu.vector_store %arg3[%173, %c0_48, %c0_49], %176 {strides = array<i32>} : memref<8x8x32xf32, #tpu.memory_space<vmem>>, vector<1x8x32xf32>,
    %c6_i32 = arith.constant 6 : i32
    %177 = arith.truncf %172 : vector<8x32xf32> to vector<8x32xbf16>
    %cst_50 = arith.constant dense<0.000000e+00> : vector<8x128xf32>
    %178 = tpu.matmul %177, %3, %cst_50 {dimension_numbers = #tpu.dot_dimension_numbers<[1], [0], [0], [1], [0, 0, 1, 1], [], []>} : vector<8x32xbf16>, vector<32x128xbf16>, vector<8x128xf32> -> vector<8x128xf32>
    %179 = arith.index_cast %c6_i32 : i32 to index
    %c0_51 = arith.constant 0 : index
    %c0_52 = arith.constant 0 : index
    %180 = vector.load %arg1[%179, %c0_51, %c0_52] : memref<8x8x128xbf16, #tpu.memory_space<vmem>>, vector<1x8x128xbf16>
    %181 = vector.shape_cast %180 : vector<1x8x128xbf16> to vector<8x128xbf16>
    %182 = arith.extf %181 : vector<8x128xbf16> to vector<8x128xf32>
    %183 = arith.addf %182, %178 : vector<8x128xf32>
    %184 = arith.mulf %183, %12 : vector<8x128xf32>
    %185 = math.tanh %184 : vector<8x128xf32>
    %cst_53 = arith.constant 5.000000e-01 : f32
    %186 = vector.broadcast %cst_53 : f32 to vector<8x128xf32>
    %187 = arith.mulf %186, %185 : vector<8x128xf32>
    %cst_54 = arith.constant 5.000000e-01 : f32
    %188 = vector.broadcast %cst_54 : f32 to vector<8x128xf32>
    %189 = arith.addf %187, %188 : vector<8x128xf32>
    %190 = arith.select %9, %185, %189 : vector<8x128xi1>, vector<8x128xf32>
    %191 = vector.extract_strided_slice %190 {offsets = [0, 0], sizes = [8, 32], strides = [1, 1]} : vector<8x128xf32> to vector<8x32xf32>
    %192 = vector.extract_strided_slice %190 {offsets = [0, 32], sizes = [8, 32], strides = [1, 1]} : vector<8x128xf32> to vector<8x32xf32>
    %193 = vector.extract_strided_slice %190 {offsets = [0, 64], sizes = [8, 32], strides = [1, 1]} : vector<8x128xf32> to vector<8x32xf32>
    %194 = vector.extract_strided_slice %190 {offsets = [0, 96], sizes = [8, 32], strides = [1, 1]} : vector<8x128xf32> to vector<8x32xf32>
    %195 = arith.mulf %192, %170 : vector<8x32xf32>
    %196 = arith.mulf %191, %193 : vector<8x32xf32>
    %197 = arith.addf %195, %196 : vector<8x32xf32>
    %198 = math.tanh %197 : vector<8x32xf32>
    %199 = arith.mulf %194, %198 : vector<8x32xf32>
    %200 = arith.index_cast %c6_i32 : i32 to index
    %c0_55 = arith.constant 0 : index
    %c0_56 = arith.constant 0 : index
    %201 = vector.load %arg3[%200, %c0_55, %c0_56] : memref<8x8x32xf32, #tpu.memory_space<vmem>>, vector<1x8x32xf32>
    %202 = vector.shape_cast %201 : vector<1x8x32xf32> to vector<8x32xf32>
    %203 = vector.shape_cast %199 : vector<8x32xf32> to vector<1x8x32xf32>
    tpu.vector_store %arg3[%200, %c0_55, %c0_56], %203 {strides = array<i32>} : memref<8x8x32xf32, #tpu.memory_space<vmem>>, vector<1x8x32xf32>,
    %c7_i32 = arith.constant 7 : i32
    %204 = arith.truncf %199 : vector<8x32xf32> to vector<8x32xbf16>
    %cst_57 = arith.constant dense<0.000000e+00> : vector<8x128xf32>
    %205 = tpu.matmul %204, %3, %cst_57 {dimension_numbers = #tpu.dot_dimension_numbers<[1], [0], [0], [1], [0, 0, 1, 1], [], []>} : vector<8x32xbf16>, vector<32x128xbf16>, vector<8x128xf32> -> vector<8x128xf32>
    %206 = arith.index_cast %c7_i32 : i32 to index
    %c0_58 = arith.constant 0 : index
    %c0_59 = arith.constant 0 : index
    %207 = vector.load %arg1[%206, %c0_58, %c0_59] : memref<8x8x128xbf16, #tpu.memory_space<vmem>>, vector<1x8x128xbf16>
    %208 = vector.shape_cast %207 : vector<1x8x128xbf16> to vector<8x128xbf16>
    %209 = arith.extf %208 : vector<8x128xbf16> to vector<8x128xf32>
    %210 = arith.addf %209, %205 : vector<8x128xf32>
    %211 = arith.mulf %210, %12 : vector<8x128xf32>
    %212 = math.tanh %211 : vector<8x128xf32>
    %cst_60 = arith.constant 5.000000e-01 : f32
    %213 = vector.broadcast %cst_60 : f32 to vector<8x128xf32>
    %214 = arith.mulf %213, %212 : vector<8x128xf32>
    %cst_61 = arith.constant 5.000000e-01 : f32
    %215 = vector.broadcast %cst_61 : f32 to vector<8x128xf32>
    %216 = arith.addf %214, %215 : vector<8x128xf32>
    %217 = arith.select %9, %212, %216 : vector<8x128xi1>, vector<8x128xf32>
    %218 = vector.extract_strided_slice %217 {offsets = [0, 0], sizes = [8, 32], strides = [1, 1]} : vector<8x128xf32> to vector<8x32xf32>
    %219 = vector.extract_strided_slice %217 {offsets = [0, 32], sizes = [8, 32], strides = [1, 1]} : vector<8x128xf32> to vector<8x32xf32>
    %220 = vector.extract_strided_slice %217 {offsets = [0, 64], sizes = [8, 32], strides = [1, 1]} : vector<8x128xf32> to vector<8x32xf32>
    %221 = vector.extract_strided_slice %217 {offsets = [0, 96], sizes = [8, 32], strides = [1, 1]} : vector<8x128xf32> to vector<8x32xf32>
    %222 = arith.mulf %219, %197 : vector<8x32xf32>
    %223 = arith.mulf %218, %220 : vector<8x32xf32>
    %224 = arith.addf %222, %223 : vector<8x32xf32>
    %225 = math.tanh %224 : vector<8x32xf32>
    %226 = arith.mulf %221, %225 : vector<8x32xf32>
    %227 = arith.index_cast %c7_i32 : i32 to index
    %c0_62 = arith.constant 0 : index
    %c0_63 = arith.constant 0 : index
    %228 = vector.load %arg3[%227, %c0_62, %c0_63] : memref<8x8x32xf32, #tpu.memory_space<vmem>>, vector<1x8x32xf32>
    %229 = vector.shape_cast %228 : vector<1x8x32xf32> to vector<8x32xf32>
    %230 = vector.shape_cast %226 : vector<8x32xf32> to vector<1x8x32xf32>
    tpu.vector_store %arg3[%227, %c0_62, %c0_63], %230 {strides = array<i32>} : memref<8x8x32xf32, #tpu.memory_space<vmem>>, vector<1x8x32xf32>,
    %c8_i32 = arith.constant 8 : i32
    %c0_64 = arith.constant 0 : index
    %c0_65 = arith.constant 0 : index
    %231 = vector.load %arg4[%c0_64, %c0_65] : memref<8x32xf32, #tpu.memory_space<vmem>>, vector<8x32xf32>
    tpu.vector_store %arg4[%c0_64, %c0_65], %226 {strides = array<i32>} : memref<8x32xf32, #tpu.memory_space<vmem>>, vector<8x32xf32>,
    %c0_66 = arith.constant 0 : index
    %c0_67 = arith.constant 0 : index
    %232 = vector.load %arg5[%c0_66, %c0_67] : memref<8x32xf32, #tpu.memory_space<vmem>>, vector<8x32xf32>
    tpu.vector_store %arg5[%c0_66, %c0_67], %224 {strides = array<i32>} : memref<8x32xf32, #tpu.memory_space<vmem>>, vector<8x32xf32>,
    return
  }
  func.func @transform_0(%arg0: i32) -> (i32, i32, i32) {
    %c0_i32 = arith.constant 0 : i32
    %c0_i32_0 = arith.constant 0 : i32
    %c0_i32_1 = arith.constant 0 : i32
    return %arg0, %c0_i32, %c0_i32_0 : i32, i32, i32
  }
  func.func @transform_1(%arg0: i32) -> (i32, i32) {
    %c0_i32 = arith.constant 0 : i32
    %c0_i32_0 = arith.constant 0 : i32
    %c0_i32_1 = arith.constant 0 : i32
    return %c0_i32, %c0_i32_0 : i32, i32
  }
  func.func @transform_2(%arg0: i32) -> (i32, i32, i32) {
    %c0_i32 = arith.constant 0 : i32
    %c0_i32_0 = arith.constant 0 : i32
    %c0_i32_1 = arith.constant 0 : i32
    return %arg0, %c0_i32, %c0_i32_0 : i32, i32, i32
  }
}

</mosaic_0001>

<llo_original>
// kernel: lstm_timeseries_forward.1
$region0: #{lstm_timeseries_forward.1}
  #allocation0 [shape = 'u32[]', space=smem, size = 0x4, offset = 0x4, fixed_abs, tag = 'smem constant byte address 0x4 - core index']
  #allocation1 [shape = 'u32[144,128]{1,0:T(1,128)}', space=vmem, size = 0x12000, scoped, tag = 'internal scratch']
  #allocation2 [shape = 'f32[8,32]{1,0:T(8,128)}', space=vmem, size = 0x1000, scoped, tag = 'scratch operand']
  #allocation3 [shape = 'f32[8,32]{1,0:T(8,128)}', space=vmem, size = 0x1000, scoped, tag = 'scratch operand']
  %s0 = inlined_call_operand.vmem [shape: bf16[8,8,128], index: 0, kind: input, shape index: {}]
  %s1 = inlined_call_operand.vmem [shape: bf16[32,128], index: 1, kind: input, shape index: {}]
  %s2 = inlined_call_operand.vmem [shape: f32[8,8,32], index: 2, kind: output, shape index: {}]
  %s3 = sld [smem:[#allocation0]]
  $region22: #{lstm_timeseries_forward.1} parent=0
    _
  %s5 = ssub.s32 1, %s3
  %s6 = scalar_select 0, %s5, %s3
  // Predicated region
  $region2: #{lstm_timeseries_forward.1} parent=0 // pred_check
    _
  $region3: #{lstm_timeseries_forward.1} parent=0 // pred_check_branch
    %8 = sbr.rel (0) target = $region5
  $region4: #{lstm_timeseries_forward.1} parent=0 // pred_region
    _
  $region5: #{lstm_timeseries_forward.1} parent=0 // pred_fallthru
    _
  // Predicated region
  $region6: #{lstm_timeseries_forward.1} parent=0 // pred_check
    _
  $region7: #{lstm_timeseries_forward.1} parent=0 // pred_check_branch
    %10 = sbr.rel (0) target = $region9
  $region8: #{lstm_timeseries_forward.1} parent=0 // pred_region
    _
  $region9: #{lstm_timeseries_forward.1} parent=0 // pred_fallthru
    _
  %p12 = scmp.eq.s32.totalorder 0, 0
  // Predicated region
  $region10: #{lstm_timeseries_forward.1} parent=0 // pred_check
    %p13 = pneg %p12
  $region11: #{lstm_timeseries_forward.1} parent=0 // pred_check_branch
    %15 = sbr.rel (%p13) target = $region13
  $region12: #{lstm_timeseries_forward.1} parent=0 // pred_region
    %vm16 = vcmask 261120
    %17 = vst.msk [vmem:[#allocation2] sm:$0xff] %vm16, 0.0
    %18 = vst.msk [vmem:[#allocation3] sm:$0xff] %vm16, 0.0
  $region13: #{lstm_timeseries_forward.1} parent=0 // pred_fallthru
    _
  %v19 = vld [vmem:[%s1] sm:$0xf]
  %v20 = vld [vmem:[%s1 + $0x4] sm:$0xf]
  %v21 = vld [vmem:[%s1 + $0x8] sm:$0xf]
  %v22 = vld [vmem:[%s1 + $0xc] sm:$0xf]
  %v23 = vlaneseq
  %v24 = vand.u32 %v23, 127
  %vm25 = vcmp.ge.s32.totalorder %v24, 64
  %vm26 = vcmp.lt.s32.totalorder %v24, 96
  %vm27 = vmand %vm25, %vm26
  %v28 = vsel %vm27, 1.0, 0.5
  %v29 = vld [vmem:[#allocation2] sm:$0xff]
  %v30 = vld [vmem:[#allocation3] sm:$0xff]
  %v31 = vpack.c.bf16 %v29, %v29
  %v36 = vunpack.c.l.b16 %v19
  %v37 = vunpack.c.l.b16 %v20
  %v38 = vunpack.c.l.b16 %v21
  %v39 = vunpack.c.l.b16 %v22
  %v40 = vpack.c.b16 %v37, %v36
  %v41 = vpack.c.b16 %v39, %v38
  %vm44 = vcmask 261120
  %v46 = vsel %vm44, %v31, 0
  %48 = vmatprep.subr.bf16.mxu0 0
  %49 = vmatpush1.bf16.msra.mxu0 %v40
  %50 = vmatprep.subr.bf16.mxu0 0
  %51 = vmatpush1.bf16.msra.mxu0 %v41
  %52 = vmatprep.subr.bf16.mxu0 0
  %53 = vmatpush1.bf16.msra.mxu0 0
  %54 = vmatprep.subr.bf16.mxu0 0
  %55 = vmatpush1.bf16.msra.mxu0 0
  %56 = vmatprep.subr.bf16.mxu0 0
  %57 = vmatpush1.bf16.msra.mxu0 0
  %58 = vmatprep.subr.bf16.mxu0 0
  %59 = vmatpush1.bf16.msra.mxu0 0
  %60 = vmatprep.subr.bf16.mxu0 0
  %61 = vmatpush1.bf16.msra.mxu0 0
  %62 = vmatprep.subr.bf16.mxu0 0
  %63 = vmatpush1.bf16.msra.mxu0 0
  %64 = vmatprep.subr.bf16.mxu0 0
  %65 = vmatpush1.bf16.msra.mxu0 0
  %66 = vmatprep.subr.bf16.mxu0 0
  %67 = vmatpush1.bf16.msra.mxu0 0
  %68 = vmatprep.subr.bf16.mxu0 0
  %69 = vmatpush1.bf16.msra.mxu0 0
  %70 = vmatprep.subr.bf16.mxu0 0
  %71 = vmatpush1.bf16.msra.mxu0 0
  %72 = vmatprep.subr.bf16.mxu0 0
  %73 = vmatpush1.bf16.msra.mxu0 0
  %74 = vmatprep.subr.bf16.mxu0 0
  %75 = vmatpush1.bf16.msra.mxu0 0
  %76 = vmatprep.subr.bf16.mxu0 0
  %77 = vmatpush1.bf16.msra.mxu0 0
  %78 = vmatprep.subr.bf16.mxu0 0
  %79 = vmatpush1.bf16.msra.mxu0 0
  %80 = vmatprep.mubr.bf16.mxu0 0
  %81 = vmatmul.mubr.bf16.gmra.mrb[0].mxu0 %v46
  %v82 = vpop.f32.mrb[0].mxu0
  %v83 = vadd.f32 0.0, %v82
  %v84 = vpop.f32.mrb[0].mxu0
  %v85 = vpop.f32.mrb[0].mxu0
  %v86 = vpop.f32.mrb[0].mxu0
  %87 = vdwg.mxu0
  %v88 = vld [vmem:[%s0] sm:$0xf]
  %v89 = vunpack.c.l.bf16 %v88
  %v90 = vadd.f32 %v89, %v83
  %v91 = vmul.f32 %v90, %v28
  %v92 = vtanh.pop %v91
  %v93 = vmul.f32 %v92, 0.5
  %v94 = vadd.f32 %v93, 0.5
  %v95 = vsel %vm27, %v92, %v94
  %97 = vrot.lane.b32.xlu0 %v30, 32
  %v98 = vpop.permute.xlu0 %97
  %v100 = vmul.f32 %v95, %v98
  %102 = vrot.lane.b32.xlu0 %v95, 64
  %v103 = vpop.permute.xlu0 %102
  %v105 = vmul.f32 %v95, %v103
  %107 = vrot.lane.b32.xlu0 %v105, 32
  %v108 = vpop.permute.xlu0 %107
  %v110 = vadd.f32 %v100, %v108
  %v111 = vtanh.pop %v110
  %113 = vrot.lane.b32.xlu0 %v111, 64
  %v114 = vpop.permute.xlu0 %113
  %v116 = vmul.f32 %v95, %v114
  %118 = vrot.lane.b32.xlu0 %v116, 32
  %v119 = vpop.permute.xlu0 %118
  %121 = vst.msk [vmem:[%s2] sm:$0xff] %vm44, %v119
  %v122 = vpack.c.bf16 %v116, %v116
  %124 = vrot.lane.b32.xlu0 %v122, 32
  %v125 = vpop.permute.xlu0 %124
  %v127 = vsel %vm44, %v125, 0
  %129 = vmatprep.subr.bf16.mxu0 0
  %130 = vmatpush1.bf16.msra.mxu0 %v40
  %131 = vmatprep.subr.bf16.mxu0 0
  %132 = vmatpush1.bf16.msra.mxu0 %v41
  %133 = vmatprep.subr.bf16.mxu0 0
  %134 = vmatpush1.bf16.msra.mxu0 0
  %135 = vmatprep.subr.bf16.mxu0 0
  %136 = vmatpush1.bf16.msra.mxu0 0
  %137 = vmatprep.subr.bf16.mxu0 0
  %138 = vmatpush1.bf16.msra.mxu0 0
  %139 = vmatprep.subr.bf16.mxu0 0
  %140 = vmatpush1.bf16.msra.mxu0 0
  %141 = vmatprep.subr.bf16.mxu0 0
  %142 = vmatpush1.bf16.msra.mxu0 0
  %143 = vmatprep.subr.bf16.mxu0 0
  %144 = vmatpush1.bf16.msra.mxu0 0
  %145 = vmatprep.subr.bf16.mxu0 0
  %146 = vmatpush1.bf16.msra.mxu0 0
  %147 = vmatprep.subr.bf16.mxu0 0
  %148 = vmatpush1.bf16.msra.mxu0 0
  %149 = vmatprep.subr.bf16.mxu0 0
  %150 = vmatpush1.bf16.msra.mxu0 0
  %151 = vmatprep.subr.bf16.mxu0 0
  %152 = vmatpush1.bf16.msra.mxu0 0
  %153 = vmatprep.subr.bf16.mxu0 0
  %154 = vmatpush1.bf16.msra.mxu0 0
  %155 = vmatprep.subr.bf16.mxu0 0
  %156 = vmatpush1.bf16.msra.mxu0 0
  %157 = vmatprep.subr.bf16.mxu0 0
  %158 = vmatpush1.bf16.msra.mxu0 0
  %159 = vmatprep.subr.bf16.mxu0 0
  %160 = vmatpush1.bf16.msra.mxu0 0
  %161 = vmatprep.mubr.bf16.mxu0 0
  %162 = vmatmul.mubr.bf16.gmra.mrb[0].mxu0 %v127
  %v163 = vpop.f32.mrb[0].mxu0
  %v164 = vadd.f32 0.0, %v163
  %v165 = vpop.f32.mrb[0].mxu0
  %v166 = vpop.f32.mrb[0].mxu0
  %v167 = vpop.f32.mrb[0].mxu0
  %168 = vdwg.mxu0
  %s169 = scalar_lea.vmem %s0, 4
  %v170 = vld [vmem:[%s169] sm:$0xf]
  %v171 = vunpack.c.l.bf16 %v170
  %v172 = vadd.f32 %v171, %v164
  %v173 = vmul.f32 %v172, %v28
  %v174 = vtanh.pop %v173
  %v175 = vmul.f32 %v174, 0.5
  %v176 = vadd.f32 %v175, 0.5
  %v177 = vsel %vm27, %v174, %v176
  %v178 = vmul.f32 %v177, %v110
  %180 = vrot.lane.b32.xlu0 %v177, 64
  %v181 = vpop.permute.xlu0 %180
  %v183 = vmul.f32 %v177, %v181
  %185 = vrot.lane.b32.xlu0 %v183, 32
  %v186 = vpop.permute.xlu0 %185
  %v188 = vadd.f32 %v178, %v186
  %v189 = vtanh.pop %v188
  %191 = vrot.lane.b32.xlu0 %v189, 64
  %v192 = vpop.permute.xlu0 %191
  %v194 = vmul.f32 %v177, %v192
  %196 = vrot.lane.b32.xlu0 %v194, 32
  %v197 = vpop.permute.xlu0 %196
  %s199 = scalar_lea.vmem %s2, 8
  %200 = vst.msk [vmem:[%s199] sm:$0xff] %vm44, %v197
  %v201 = vpack.c.bf16 %v194, %v194
  %203 = vrot.lane.b32.xlu0 %v201, 32
  %v204 = vpop.permute.xlu0 %203
  %v206 = vsel %vm44, %v204, 0
  %208 = vmatprep.subr.bf16.mxu0 0
  %209 = vmatpush1.bf16.msra.mxu0 %v40
  %210 = vmatprep.subr.bf16.mxu0 0
  %211 = vmatpush1.bf16.msra.mxu0 %v41
  %212 = vmatprep.subr.bf16.mxu0 0
  %213 = vmatpush1.bf16.msra.mxu0 0
  %214 = vmatprep.subr.bf16.mxu0 0
  %215 = vmatpush1.bf16.msra.mxu0 0
  %216 = vmatprep.subr.bf16.mxu0 0
  %217 = vmatpush1.bf16.msra.mxu0 0
  %218 = vmatprep.subr.bf16.mxu0 0
  %219 = vmatpush1.bf16.msra.mxu0 0
  %220 = vmatprep.subr.bf16.mxu0 0
  %221 = vmatpush1.bf16.msra.mxu0 0
  %222 = vmatprep.subr.bf16.mxu0 0
  %223 = vmatpush1.bf16.msra.mxu0 0
  %224 = vmatprep.subr.bf16.mxu0 0
  %225 = vmatpush1.bf16.msra.mxu0 0
  %226 = vmatprep.subr.bf16.mxu0 0
  %227 = vmatpush1.bf16.msra.mxu0 0
  %228 = vmatprep.subr.bf16.mxu0 0
  %229 = vmatpush1.bf16.msra.mxu0 0
  %230 = vmatprep.subr.bf16.mxu0 0
  %231 = vmatpush1.bf16.msra.mxu0 0
  %232 = vmatprep.subr.bf16.mxu0 0
  %233 = vmatpush1.bf16.msra.mxu0 0
  %234 = vmatprep.subr.bf16.mxu0 0
  %235 = vmatpush1.bf16.msra.mxu0 0
  %236 = vmatprep.subr.bf16.mxu0 0
  %237 = vmatpush1.bf16.msra.mxu0 0
  %238 = vmatprep.subr.bf16.mxu0 0
  %239 = vmatpush1.bf16.msra.mxu0 0
  %240 = vmatprep.mubr.bf16.mxu0 0
  %241 = vmatmul.mubr.bf16.gmra.mrb[0].mxu0 %v206
  %v242 = vpop.f32.mrb[0].mxu0
  %v243 = vadd.f32 0.0, %v242
  %v244 = vpop.f32.mrb[0].mxu0
  %v245 = vpop.f32.mrb[0].mxu0
  %v246 = vpop.f32.mrb[0].mxu0
  %247 = vdwg.mxu0
  %s248 = scalar_lea.vmem %s0, 8
  %v249 = vld [vmem:[%s248] sm:$0xf]
  %v250 = vunpack.c.l.bf16 %v249
  %v251 = vadd.f32 %v250, %v243
  %v252 = vmul.f32 %v251, %v28
  %v253 = vtanh.pop %v252
  %v254 = vmul.f32 %v253, 0.5
  %v255 = vadd.f32 %v254, 0.5
  %v256 = vsel %vm27, %v253, %v255
  %v257 = vmul.f32 %v256, %v188
  %259 = vrot.lane.b32.xlu0 %v256, 64
  %v260 = vpop.permute.xlu0 %259
  %v262 = vmul.f32 %v256, %v260
  %264 = vrot.lane.b32.xlu0 %v262, 32
  %v265 = vpop.permute.xlu0 %264
  %v267 = vadd.f32 %v257, %v265
  %v268 = vtanh.pop %v267
  %270 = vrot.lane.b32.xlu0 %v268, 64
  %v271 = vpop.permute.xlu0 %270
  %v273 = vmul.f32 %v256, %v271
  %275 = vrot.lane.b32.xlu0 %v273, 32
  %v276 = vpop.permute.xlu0 %275
  %s278 = scalar_lea.vmem %s2, 16
  %279 = vst.msk [vmem:[%s278] sm:$0xff] %vm44, %v276
  %v280 = vpack.c.bf16 %v273, %v273
  %282 = vrot.lane.b32.xlu0 %v280, 32
  %v283 = vpop.permute.xlu0 %282
  %v285 = vsel %vm44, %v283, 0
  %287 = vmatprep.subr.bf16.mxu0 0
  %288 = vmatpush1.bf16.msra.mxu0 %v40
  %289 = vmatprep.subr.bf16.mxu0 0
  %290 = vmatpush1.bf16.msra.mxu0 %v41
  %291 = vmatprep.subr.bf16.mxu0 0
  %292 = vmatpush1.bf16.msra.mxu0 0
  %293 = vmatprep.subr.bf16.mxu0 0
  %294 = vmatpush1.bf16.msra.mxu0 0
  %295 = vmatprep.subr.bf16.mxu0 0
  %296 = vmatpush1.bf16.msra.mxu0 0
  %297 = vmatprep.subr.bf16.mxu0 0
  %298 = vmatpush1.bf16.msra.mxu0 0
  %299 = vmatprep.subr.bf16.mxu0 0
  %300 = vmatpush1.bf16.msra.mxu0 0
  %301 = vmatprep.subr.bf16.mxu0 0
  %302 = vmatpush1.bf16.msra.mxu0 0
  %303 = vmatprep.subr.bf16.mxu0 0
  %304 = vmatpush1.bf16.msra.mxu0 0
  %305 = vmatprep.subr.bf16.mxu0 0
  %306 = vmatpush1.bf16.msra.mxu0 0
  %307 = vmatprep.subr.bf16.mxu0 0
  %308 = vmatpush1.bf16.msra.mxu0 0
  %309 = vmatprep.subr.bf16.mxu0 0
  %310 = vmatpush1.bf16.msra.mxu0 0
  %311 = vmatprep.subr.bf16.mxu0 0
  %312 = vmatpush1.bf16.msra.mxu0 0
  %313 = vmatprep.subr.bf16.mxu0 0
  %314 = vmatpush1.bf16.msra.mxu0 0
  %315 = vmatprep.subr.bf16.mxu0 0
  %316 = vmatpush1.bf16.msra.mxu0 0
  %317 = vmatprep.subr.bf16.mxu0 0
  %318 = vmatpush1.bf16.msra.mxu0 0
  %319 = vmatprep.mubr.bf16.mxu0 0
  %320 = vmatmul.mubr.bf16.gmra.mrb[0].mxu0 %v285
  %v321 = vpop.f32.mrb[0].mxu0
  %v322 = vadd.f32 0.0, %v321
  %v323 = vpop.f32.mrb[0].mxu0
  %v324 = vpop.f32.mrb[0].mxu0
  %v325 = vpop.f32.mrb[0].mxu0
  %326 = vdwg.mxu0
  %s327 = scalar_lea.vmem %s0, 12
  %v328 = vld [vmem:[%s327] sm:$0xf]
  %v329 = vunpack.c.l.bf16 %v328
  %v330 = vadd.f32 %v329, %v322
  %v331 = vmul.f32 %v330, %v28
  %v332 = vtanh.pop %v331
  %v333 = vmul.f32 %v332, 0.5
  %v334 = vadd.f32 %v333, 0.5
  %v335 = vsel %vm27, %v332, %v334
  %v336 = vmul.f32 %v335, %v267
  %338 = vrot.lane.b32.xlu0 %v335, 64
  %v339 = vpop.permute.xlu0 %338
  %v341 = vmul.f32 %v335, %v339
  %343 = vrot.lane.b32.xlu0 %v341, 32
  %v344 = vpop.permute.xlu0 %343
  %v346 = vadd.f32 %v336, %v344
  %v347 = vtanh.pop %v346
  %349 = vrot.lane.b32.xlu0 %v347, 64
  %v350 = vpop.permute.xlu0 %349
  %v352 = vmul.f32 %v335, %v350
  %354 = vrot.lane.b32.xlu0 %v352, 32
  %v355 = vpop.permute.xlu0 %354
  %s357 = scalar_lea.vmem %s2, 24
  %358 = vst.msk [vmem:[%s357] sm:$0xff] %vm44, %v355
  %v359 = vpack.c.bf16 %v352, %v352
  %361 = vrot.lane.b32.xlu0 %v359, 32
  %v362 = vpop.permute.xlu0 %361
  %v364 = vsel %vm44, %v362, 0
  %366 = vmatprep.subr.bf16.mxu0 0
  %367 = vmatpush1.bf16.msra.mxu0 %v40
  %368 = vmatprep.subr.bf16.mxu0 0
  %369 = vmatpush1.bf16.msra.mxu0 %v41
  %370 = vmatprep.subr.bf16.mxu0 0
  %371 = vmatpush1.bf16.msra.mxu0 0
  %372 = vmatprep.subr.bf16.mxu0 0
  %373 = vmatpush1.bf16.msra.mxu0 0
  %374 = vmatprep.subr.bf16.mxu0 0
  %375 = vmatpush1.bf16.msra.mxu0 0
  %376 = vmatprep.subr.bf16.mxu0 0
  %377 = vmatpush1.bf16.msra.mxu0 0
  %378 = vmatprep.subr.bf16.mxu0 0
  %379 = vmatpush1.bf16.msra.mxu0 0
  %380 = vmatprep.subr.bf16.mxu0 0
  %381 = vmatpush1.bf16.msra.mxu0 0
  %382 = vmatprep.subr.bf16.mxu0 0
  %383 = vmatpush1.bf16.msra.mxu0 0
  %384 = vmatprep.subr.bf16.mxu0 0
  %385 = vmatpush1.bf16.msra.mxu0 0
  %386 = vmatprep.subr.bf16.mxu0 0
  %387 = vmatpush1.bf16.msra.mxu0 0
  %388 = vmatprep.subr.bf16.mxu0 0
  %389 = vmatpush1.bf16.msra.mxu0 0
  %390 = vmatprep.subr.bf16.mxu0 0
  %391 = vmatpush1.bf16.msra.mxu0 0
  %392 = vmatprep.subr.bf16.mxu0 0
  %393 = vmatpush1.bf16.msra.mxu0 0
  %394 = vmatprep.subr.bf16.mxu0 0
  %395 = vmatpush1.bf16.msra.mxu0 0
  %396 = vmatprep.subr.bf16.mxu0 0
  %397 = vmatpush1.bf16.msra.mxu0 0
  %398 = vmatprep.mubr.bf16.mxu0 0
  %399 = vmatmul.mubr.bf16.gmra.mrb[0].mxu0 %v364
  %v400 = vpop.f32.mrb[0].mxu0
  %v401 = vadd.f32 0.0, %v400
  %v402 = vpop.f32.mrb[0].mxu0
  %v403 = vpop.f32.mrb[0].mxu0
  %v404 = vpop.f32.mrb[0].mxu0
  %405 = vdwg.mxu0
  %s406 = scalar_lea.vmem %s0, 16
  %v407 = vld [vmem:[%s406] sm:$0xf]
  %v408 = vunpack.c.l.bf16 %v407
  %v409 = vadd.f32 %v408, %v401
  %v410 = vmul.f32 %v409, %v28
  %v411 = vtanh.pop %v410
  %v412 = vmul.f32 %v411, 0.5
  %v413 = vadd.f32 %v412, 0.5
  %v414 = vsel %vm27, %v411, %v413
  %v415 = vmul.f32 %v414, %v346
  %417 = vrot.lane.b32.xlu0 %v414, 64
  %v418 = vpop.permute.xlu0 %417
  %v420 = vmul.f32 %v414, %v418
  %422 = vrot.lane.b32.xlu0 %v420, 32
  %v423 = vpop.permute.xlu0 %422
  %v425 = vadd.f32 %v415, %v423
  %v426 = vtanh.pop %v425
  %428 = vrot.lane.b32.xlu0 %v426, 64
  %v429 = vpop.permute.xlu0 %428
  %v431 = vmul.f32 %v414, %v429
  %433 = vrot.lane.b32.xlu0 %v431, 32
  %v434 = vpop.permute.xlu0 %433
  %s436 = scalar_lea.vmem %s2, 32
  %437 = vst.msk [vmem:[%s436] sm:$0xff] %vm44, %v434
  %v438 = vpack.c.bf16 %v431, %v431
  %440 = vrot.lane.b32.xlu0 %v438, 32
  %v441 = vpop.permute.xlu0 %440
  %v443 = vsel %vm44, %v441, 0
  %445 = vmatprep.subr.bf16.mxu0 0
  %446 = vmatpush1.bf16.msra.mxu0 %v40
  %447 = vmatprep.subr.bf16.mxu0 0
  %448 = vmatpush1.bf16.msra.mxu0 %v41
  %449 = vmatprep.subr.bf16.mxu0 0
  %450 = vmatpush1.bf16.msra.mxu0 0
  %451 = vmatprep.subr.bf16.mxu0 0
  %452 = vmatpush1.bf16.msra.mxu0 0
  %453 = vmatprep.subr.bf16.mxu0 0
  %454 = vmatpush1.bf16.msra.mxu0 0
  %455 = vmatprep.subr.bf16.mxu0 0
  %456 = vmatpush1.bf16.msra.mxu0 0
  %457 = vmatprep.subr.bf16.mxu0 0
  %458 = vmatpush1.bf16.msra.mxu0 0
  %459 = vmatprep.subr.bf16.mxu0 0
  %460 = vmatpush1.bf16.msra.mxu0 0
  %461 = vmatprep.subr.bf16.mxu0 0
  %462 = vmatpush1.bf16.msra.mxu0 0
  %463 = vmatprep.subr.bf16.mxu0 0
  %464 = vmatpush1.bf16.msra.mxu0 0
  %465 = vmatprep.subr.bf16.mxu0 0
  %466 = vmatpush1.bf16.msra.mxu0 0
  %467 = vmatprep.subr.bf16.mxu0 0
  %468 = vmatpush1.bf16.msra.mxu0 0
  %469 = vmatprep.subr.bf16.mxu0 0
  %470 = vmatpush1.bf16.msra.mxu0 0
  %471 = vmatprep.subr.bf16.mxu0 0
  %472 = vmatpush1.bf16.msra.mxu0 0
  %473 = vmatprep.subr.bf16.mxu0 0
  %474 = vmatpush1.bf16.msra.mxu0 0
  %475 = vmatprep.subr.bf16.mxu0 0
  %476 = vmatpush1.bf16.msra.mxu0 0
  %477 = vmatprep.mubr.bf16.mxu0 0
  %478 = vmatmul.mubr.bf16.gmra.mrb[0].mxu0 %v443
  %v479 = vpop.f32.mrb[0].mxu0
  %v480 = vadd.f32 0.0, %v479
  %v481 = vpop.f32.mrb[0].mxu0
  %v482 = vpop.f32.mrb[0].mxu0
  %v483 = vpop.f32.mrb[0].mxu0
  %484 = vdwg.mxu0
  %s485 = scalar_lea.vmem %s0, 20
  %v486 = vld [vmem:[%s485] sm:$0xf]
  %v487 = vunpack.c.l.bf16 %v486
  %v488 = vadd.f32 %v487, %v480
  %v489 = vmul.f32 %v488, %v28
  %v490 = vtanh.pop %v489
  %v491 = vmul.f32 %v490, 0.5
  %v492 = vadd.f32 %v491, 0.5
  %v493 = vsel %vm27, %v490, %v492
  %v494 = vmul.f32 %v493, %v425
  %496 = vrot.lane.b32.xlu0 %v493, 64
  %v497 = vpop.permute.xlu0 %496
  %v499 = vmul.f32 %v493, %v497
  %501 = vrot.lane.b32.xlu0 %v499, 32
  %v502 = vpop.permute.xlu0 %501
  %v504 = vadd.f32 %v494, %v502
  %v505 = vtanh.pop %v504
  %507 = vrot.lane.b32.xlu0 %v505, 64
  %v508 = vpop.permute.xlu0 %507
  %v510 = vmul.f32 %v493, %v508
  %512 = vrot.lane.b32.xlu0 %v510, 32
  %v513 = vpop.permute.xlu0 %512
  %s515 = scalar_lea.vmem %s2, 40
  %516 = vst.msk [vmem:[%s515] sm:$0xff] %vm44, %v513
  %v517 = vpack.c.bf16 %v510, %v510
  %519 = vrot.lane.b32.xlu0 %v517, 32
  %v520 = vpop.permute.xlu0 %519
  %v522 = vsel %vm44, %v520, 0
  %524 = vmatprep.subr.bf16.mxu0 0
  %525 = vmatpush1.bf16.msra.mxu0 %v40
  %526 = vmatprep.subr.bf16.mxu0 0
  %527 = vmatpush1.bf16.msra.mxu0 %v41
  %528 = vmatprep.subr.bf16.mxu0 0
  %529 = vmatpush1.bf16.msra.mxu0 0
  %530 = vmatprep.subr.bf16.mxu0 0
  %531 = vmatpush1.bf16.msra.mxu0 0
  %532 = vmatprep.subr.bf16.mxu0 0
  %533 = vmatpush1.bf16.msra.mxu0 0
  %534 = vmatprep.subr.bf16.mxu0 0
  %535 = vmatpush1.bf16.msra.mxu0 0
  %536 = vmatprep.subr.bf16.mxu0 0
  %537 = vmatpush1.bf16.msra.mxu0 0
  %538 = vmatprep.subr.bf16.mxu0 0
  %539 = vmatpush1.bf16.msra.mxu0 0
  %540 = vmatprep.subr.bf16.mxu0 0
  %541 = vmatpush1.bf16.msra.mxu0 0
  %542 = vmatprep.subr.bf16.mxu0 0
  %543 = vmatpush1.bf16.msra.mxu0 0
  %544 = vmatprep.subr.bf16.mxu0 0
  %545 = vmatpush1.bf16.msra.mxu0 0
  %546 = vmatprep.subr.bf16.mxu0 0
  %547 = vmatpush1.bf16.msra.mxu0 0
  %548 = vmatprep.subr.bf16.mxu0 0
  %549 = vmatpush1.bf16.msra.mxu0 0
  %550 = vmatprep.subr.bf16.mxu0 0
  %551 = vmatpush1.bf16.msra.mxu0 0
  %552 = vmatprep.subr.bf16.mxu0 0
  %553 = vmatpush1.bf16.msra.mxu0 0
  %554 = vmatprep.subr.bf16.mxu0 0
  %555 = vmatpush1.bf16.msra.mxu0 0
  %556 = vmatprep.mubr.bf16.mxu0 0
  %557 = vmatmul.mubr.bf16.gmra.mrb[0].mxu0 %v522
  %v558 = vpop.f32.mrb[0].mxu0
  %v559 = vadd.f32 0.0, %v558
  %v560 = vpop.f32.mrb[0].mxu0
  %v561 = vpop.f32.mrb[0].mxu0
  %v562 = vpop.f32.mrb[0].mxu0
  %563 = vdwg.mxu0
  %s564 = scalar_lea.vmem %s0, 24
  %v565 = vld [vmem:[%s564] sm:$0xf]
  %v566 = vunpack.c.l.bf16 %v565
  %v567 = vadd.f32 %v566, %v559
  %v568 = vmul.f32 %v567, %v28
  %v569 = vtanh.pop %v568
  %v570 = vmul.f32 %v569, 0.5
  %v571 = vadd.f32 %v570, 0.5
  %v572 = vsel %vm27, %v569, %v571
  %v573 = vmul.f32 %v572, %v504
  %575 = vrot.lane.b32.xlu0 %v572, 64
  %v576 = vpop.permute.xlu0 %575
  %v578 = vmul.f32 %v572, %v576
  %580 = vrot.lane.b32.xlu0 %v578, 32
  %v581 = vpop.permute.xlu0 %580
  %v583 = vadd.f32 %v573, %v581
  %v584 = vtanh.pop %v583
  %586 = vrot.lane.b32.xlu0 %v584, 64
  %v587 = vpop.permute.xlu0 %586
  %v589 = vmul.f32 %v572, %v587
  %591 = vrot.lane.b32.xlu0 %v589, 32
  %v592 = vpop.permute.xlu0 %591
  %s594 = scalar_lea.vmem %s2, 48
  %595 = vst.msk [vmem:[%s594] sm:$0xff] %vm44, %v592
  %v596 = vpack.c.bf16 %v589, %v589
  %598 = vrot.lane.b32.xlu0 %v596, 32
  %v599 = vpop.permute.xlu0 %598
  %v601 = vsel %vm44, %v599, 0
  %603 = vmatprep.subr.bf16.mxu0 0
  %604 = vmatpush1.bf16.msra.mxu0 %v40
  %605 = vmatprep.subr.bf16.mxu0 0
  %606 = vmatpush1.bf16.msra.mxu0 %v41
  %607 = vmatprep.subr.bf16.mxu0 0
  %608 = vmatpush1.bf16.msra.mxu0 0
  %609 = vmatprep.subr.bf16.mxu0 0
  %610 = vmatpush1.bf16.msra.mxu0 0
  %611 = vmatprep.subr.bf16.mxu0 0
  %612 = vmatpush1.bf16.msra.mxu0 0
  %613 = vmatprep.subr.bf16.mxu0 0
  %614 = vmatpush1.bf16.msra.mxu0 0
  %615 = vmatprep.subr.bf16.mxu0 0
  %616 = vmatpush1.bf16.msra.mxu0 0
  %617 = vmatprep.subr.bf16.mxu0 0
  %618 = vmatpush1.bf16.msra.mxu0 0
  %619 = vmatprep.subr.bf16.mxu0 0
  %620 = vmatpush1.bf16.msra.mxu0 0
  %621 = vmatprep.subr.bf16.mxu0 0
  %622 = vmatpush1.bf16.msra.mxu0 0
  %623 = vmatprep.subr.bf16.mxu0 0
  %624 = vmatpush1.bf16.msra.mxu0 0
  %625 = vmatprep.subr.bf16.mxu0 0
  %626 = vmatpush1.bf16.msra.mxu0 0
  %627 = vmatprep.subr.bf16.mxu0 0
  %628 = vmatpush1.bf16.msra.mxu0 0
  %629 = vmatprep.subr.bf16.mxu0 0
  %630 = vmatpush1.bf16.msra.mxu0 0
  %631 = vmatprep.subr.bf16.mxu0 0
  %632 = vmatpush1.bf16.msra.mxu0 0
  %633 = vmatprep.subr.bf16.mxu0 0
  %634 = vmatpush1.bf16.msra.mxu0 0
  %635 = vmatprep.mubr.bf16.mxu0 0
  %636 = vmatmul.mubr.bf16.gmra.mrb[0].mxu0 %v601
  %v637 = vpop.f32.mrb[0].mxu0
  %v638 = vadd.f32 0.0, %v637
  %v639 = vpop.f32.mrb[0].mxu0
  %v640 = vpop.f32.mrb[0].mxu0
  %v641 = vpop.f32.mrb[0].mxu0
  %642 = vdwg.mxu0
  %s643 = scalar_lea.vmem %s0, 28
  %v644 = vld [vmem:[%s643] sm:$0xf]
  %v645 = vunpack.c.l.bf16 %v644
  %v646 = vadd.f32 %v645, %v638
  %v647 = vmul.f32 %v646, %v28
  %v648 = vtanh.pop %v647
  %v649 = vmul.f32 %v648, 0.5
  %v650 = vadd.f32 %v649, 0.5
  %v651 = vsel %vm27, %v648, %v650
  %v652 = vmul.f32 %v651, %v583
  %654 = vrot.lane.b32.xlu0 %v651, 64
  %v655 = vpop.permute.xlu0 %654
  %v657 = vmul.f32 %v651, %v655
  %659 = vrot.lane.b32.xlu0 %v657, 32
  %v660 = vpop.permute.xlu0 %659
  %v662 = vadd.f32 %v652, %v660
  %v663 = vtanh.pop %v662
  %665 = vrot.lane.b32.xlu0 %v663, 64
  %v666 = vpop.permute.xlu0 %665
  %v668 = vmul.f32 %v651, %v666
  %670 = vrot.lane.b32.xlu0 %v668, 32
  %v671 = vpop.permute.xlu0 %670
  %s673 = scalar_lea.vmem %s2, 56
  %674 = vst.msk [vmem:[%s673] sm:$0xff] %vm44, %v671
  %675 = vst.msk [vmem:[#allocation2] sm:$0xff] %vm44, %v671
  %677 = vrot.lane.b32.xlu0 %v662, 96
  %v678 = vpop.permute.xlu0 %677
  %680 = vst.msk [vmem:[#allocation3] sm:$0xff] %vm44, %v678
  // Predicated region
  $region14: #{lstm_timeseries_forward.1} parent=0 // pred_check
    _
  $region15: #{lstm_timeseries_forward.1} parent=0 // pred_check_branch
    %682 = sbr.rel (0) target = $region17
  $region16: #{lstm_timeseries_forward.1} parent=0 // pred_region
    _
  $region17: #{lstm_timeseries_forward.1} parent=0 // pred_fallthru
    _
  // Predicated region
  $region18: #{lstm_timeseries_forward.1} parent=0 // pred_check
    _
  $region19: #{lstm_timeseries_forward.1} parent=0 // pred_check_branch
    %684 = sbr.rel (0) target = $region21
  $region20: #{lstm_timeseries_forward.1} parent=0 // pred_region
    _
  $region21: #{lstm_timeseries_forward.1} parent=0 // pred_fallthru
    _

</llo_original>
